<compile_context>
chip_gen: v6e
topology: v6e:2x2x1
jax: 0.10.0
libtpu: 0.0.40
codegen_flags: <defaults>
</compile_context>

<pallas_src>
import functools
import math

import jax
import jax.numpy as jnp
from jax.experimental import pallas as pl
from jax.experimental.pallas import tpu as pltpu


def make_pe_table(max_len: int, d_model: int) -> jnp.ndarray:
    """Deterministic sin/cos positional-encoding table, shape (max_len, d_model)."""
    position = jnp.arange(max_len, dtype=jnp.float32)[:, None]
    div_term = jnp.exp(
        jnp.arange(0, d_model, 2, dtype=jnp.float32) * (-math.log(10000.0) / d_model)
    )
    pe = jnp.zeros((max_len, d_model), dtype=jnp.float32)
    pe = pe.at[:, 0::2].set(jnp.sin(position * div_term))
    pe = pe.at[:, 1::2].set(jnp.cos(position * div_term))
    return pe


def _scale_pe_kernel(x_ref, pe_ref, o_ref, *, scale):
    # x_ref: (B, ts, D)  pe_ref: (ts, D)  o_ref: (B, ts, D)
    x = x_ref[...].astype(jnp.float32)
    y = x * jnp.float32(scale) + pe_ref[...].astype(jnp.float32)[None, :, :]
    o_ref[...] = y.astype(o_ref.dtype)


def _scale_pe_dropout_kernel(x_ref, pe_ref, m_ref, o_ref, *, scale):
    # Same as above plus inverted-dropout mask multiply (mask is 0 or 1/keep_p).
    x = x_ref[...].astype(jnp.float32)
    y = x * jnp.float32(scale) + pe_ref[...].astype(jnp.float32)[None, :, :]
    y = y * m_ref[...].astype(jnp.float32)
    o_ref[...] = y.astype(o_ref.dtype)


def _choose_seq_tile(S, B, D, itemsize, target_bytes=2 << 20):
    """Largest sequence tile dividing S that is 8-aligned (or == S) and keeps the
    (B, ts, D) block around ~2 MiB so the DMA stream sits near the HBM roofline."""
    cands = [t for t in range(1, S + 1) if S % t == 0 and (t % 8 == 0 or t == S)]
    fits = [t for t in cands if B * t * D * itemsize <= target_bytes]
    return max(fits) if fits else min(cands)


def fused_embed_scale_pos_encode(token_ids, embedding_table, pe_table, *,
                                 dropout_mask=None, ts=None):
    """token_ids: (B, S) int32. Returns (B, S, D) =
       dropout(Embedding(tokens) * sqrt(D) + pe[:S] broadcast over batch)."""
    B, S = token_ids.shape
    _, D = embedding_table.shape
    assert pe_table.shape[0] >= S and pe_table.shape[1] == D

    # Embedding gather is data-dependent row addressing -> XLA glue.
    x = jnp.take(embedding_table, token_ids, axis=0)            # (B, S, D)
    dtype = x.dtype
    itemsize = jnp.dtype(dtype).itemsize
    scale = math.sqrt(float(D))

    if ts is None:
        ts = _choose_seq_tile(S, B, D, itemsize)
    assert S % ts == 0 and (ts % 8 == 0 or ts == S)

    pe = pe_table[:S].astype(dtype)                             # (S, D)

    # Double-buffered VMEM budget for the streamed blocks (x, out, [mask]) + pe.
    n_stream_blocks = 2 + (0 if dropout_mask is None else 1)
    block_bytes = B * ts * D * itemsize
    vmem_needed = 2 * (n_stream_blocks * block_bytes + ts * D * itemsize)
    vmem_limit = int(min(max(2 * vmem_needed, 8 << 20), 32 << 20))

    x_spec = pl.BlockSpec((B, ts, D), lambda s: (0, s, 0))
    pe_spec = pl.BlockSpec((ts, D), lambda s: (s, 0))
    out_spec = pl.BlockSpec((B, ts, D), lambda s: (0, s, 0))

    compiler_params = pltpu.CompilerParams(
        dimension_semantics=("parallel",),      # v7x megacore: split tiles over TCs
        vmem_limit_bytes=vmem_limit,
    )

    if dropout_mask is None:
        kernel = functools.partial(_scale_pe_kernel, scale=scale)
        return pl.pallas_call(
            kernel,
            out_shape=jax.ShapeDtypeStruct((B, S, D), dtype),
            grid=(S // ts,),
            in_specs=[x_spec, pe_spec],
            out_specs=out_spec,
            compiler_params=compiler_params,
        )(x, pe)

    assert dropout_mask.shape == (B, S, D)
    kernel = functools.partial(_scale_pe_dropout_kernel, scale=scale)
    mask_spec = pl.BlockSpec((B, ts, D), lambda s: (0, s, 0))
    return pl.pallas_call(
        kernel,
        out_shape=jax.ShapeDtypeStruct((B, S, D), dtype),
        grid=(S // ts,),
        in_specs=[x_spec, pe_spec, mask_spec],
        out_specs=out_spec,
        compiler_params=compiler_params,
    )(x, pe, dropout_mask.astype(dtype))


if __name__ == "__main__":
    # Small shapes consistent with the module: batch=2, seq=8, d_model=256 (module
    # default), max_len=40 (max_sequence_length), small vocab, dropout p=0.1.
    B, S, D = 2, 8, 256
    VOCAB, MAX_LEN, P = 384, 40, 0.1

    key = jax.random.PRNGKey(0)
    k_emb, k_tok, k_drop = jax.random.split(key, 3)
    emb_table = jax.random.normal(k_emb, (VOCAB, D), dtype=jnp.float32) * 0.02
    tokens = jax.random.randint(k_tok, (B, S), 0, VOCAB, dtype=jnp.int32)
    pe_table = make_pe_table(MAX_LEN, D)

    # ---- Eval mode (dropout = identity), matches the module's inference forward.
    y_eval = fused_embed_scale_pos_encode(tokens, emb_table, pe_table)

    x_ref = jnp.take(emb_table, tokens, axis=0) * math.sqrt(D)
    ref_eval = x_ref + pe_table[:S][None, :, :]

    # ---- Training mode: host-side inverted-dropout mask, multiplied in-kernel.
    keep = jax.random.bernoulli(k_drop, 1.0 - P, (B, S, D))
    mask = keep.astype(jnp.float32) / (1.0 - P)
    y_train = fused_embed_scale_pos_encode(tokens, emb_table, pe_table,
                                           dropout_mask=mask)
    ref_train = ref_eval * mask

    jax.block_until_ready((y_eval, y_train))

    assert y_eval.shape == (B, S, D) and y_train.shape == (B, S, D)
    assert jnp.allclose(y_eval, ref_eval, atol=1e-5, rtol=1e-5), "eval-mode mismatch"
    assert jnp.allclose(y_train, ref_train, atol=1e-5, rtol=1e-5), "train-mode mismatch"

    print("KERNEL_OK")
</pallas_src>

<mosaic_0001>
module attributes {stable_mosaic.version = 11 : i64} {
  func.func @_scale_pe_kernel(%arg0: i32, %arg1: memref<2x8x256xf32, #tpu.memory_space<vmem>>, %arg2: memref<8x256xf32, #tpu.memory_space<vmem>>, %arg3: memref<2x8x256xf32, #tpu.memory_space<vmem>>) attributes {dimension_semantics = [#tpu.dimension_semantics<parallel>], iteration_bounds = array<i64: 1>, scalar_prefetch = 0 : i64, scratch_operands = 0 : i64, tpu.core_type = #tpu.core_type<tc>, window_params = [{transform_indices = @transform_0, window_bounds = array<i64: 2, 8, 256>}, {transform_indices = @transform_1, window_bounds = array<i64: 8, 256>}, {transform_indices = @transform_2, window_bounds = array<i64: 2, 8, 256>}]} {
    %c0 = arith.constant 0 : index
    %c0_0 = arith.constant 0 : index
    %c0_1 = arith.constant 0 : index
    %0 = vector.load %arg1[%c0, %c0_0, %c0_1] : memref<2x8x256xf32, #tpu.memory_space<vmem>>, vector<2x8x256xf32>
    %cst = arith.constant 1.600000e+01 : f32
    %1 = vector.broadcast %cst : f32 to vector<2x8x256xf32>
    %2 = arith.mulf %0, %1 : vector<2x8x256xf32>
    %c0_2 = arith.constant 0 : index
    %c0_3 = arith.constant 0 : index
    %3 = vector.load %arg2[%c0_2, %c0_3] : memref<8x256xf32, #tpu.memory_space<vmem>>, vector<8x256xf32>
    %4 = vector.shape_cast %3 : vector<8x256xf32> to vector<1x8x256xf32>
    %5 = vector.broadcast %4 : vector<1x8x256xf32> to vector<2x8x256xf32>
    %6 = arith.addf %2, %5 : vector<2x8x256xf32>
    %c0_4 = arith.constant 0 : index
    %c0_5 = arith.constant 0 : index
    %c0_6 = arith.constant 0 : index
    %7 = vector.load %arg3[%c0_4, %c0_5, %c0_6] : memref<2x8x256xf32, #tpu.memory_space<vmem>>, vector<2x8x256xf32>
    tpu.vector_store %arg3[%c0_4, %c0_5, %c0_6], %6 {strides = array<i32>} : memref<2x8x256xf32, #tpu.memory_space<vmem>>, vector<2x8x256xf32>,
    return
  }
  func.func @transform_0(%arg0: i32) -> (i32, i32, i32) {
    %c0_i32 = arith.constant 0 : i32
    %c0_i32_0 = arith.constant 0 : i32
    %c0_i32_1 = arith.constant 0 : i32
    return %c0_i32, %arg0, %c0_i32_0 : i32, i32, i32
  }
  func.func @transform_1(%arg0: i32) -> (i32, i32) {
    %c0_i32 = arith.constant 0 : i32
    %c0_i32_0 = arith.constant 0 : i32
    return %arg0, %c0_i32 : i32, i32
  }
  func.func @transform_2(%arg0: i32) -> (i32, i32, i32) {
    %c0_i32 = arith.constant 0 : i32
    %c0_i32_0 = arith.constant 0 : i32
    %c0_i32_1 = arith.constant 0 : i32
    return %c0_i32, %arg0, %c0_i32_0 : i32, i32, i32
  }
}

</mosaic_0001>

<llo_original>
// kernel: tpu_custom_call.1
$region0: #{tpu_custom_call.1}
  #allocation0 [shape = 'u32[]', space=smem, size = 0x4, offset = 0x4, fixed_abs, tag = 'smem constant byte address 0x4 - core index']
  #allocation1 [shape = 'u32[144,128]{1,0:T(1,128)}', space=vmem, size = 0x12000, scoped, tag = 'internal scratch']
  %s0 = inlined_call_operand.hbm [shape: f32[2,8,256], index: 0, kind: input, shape index: {}]
  %s1 = inlined_call_operand.hbm [shape: f32[8,256], index: 1, kind: input, shape index: {}]
  %s2 = inlined_call_operand.hbm [shape: f32[2,8,256], index: 2, kind: output, shape index: {}]
  %s3 = sld [smem:[#allocation0]]
  $region26: #{tpu_custom_call.1} parent=0
    _
  %s5 = ssub.s32 1, %s3
  %s6 = scalar_select 0, %s5, %s3
  $region1: #{tpu_custom_call.1} parent=0
    #allocation2 [shape = 'u8[16384]{0}', space=vmem, size = 0x4000, scoped, tag = 'input window, operand 0, single buffered']
    #allocation3 [shape = 's32[1]{0}', space=sflag, size = 0x4, scoped, tag = 'scoped memory for tpu_custom_call.1']
    #allocation4 [shape = 's32[1]{0}', space=sflag, size = 0x4, scoped, tag = 'scoped memory for tpu_custom_call.1']
    #allocation5 [shape = 'u8[8192]{0}', space=vmem, size = 0x2000, scoped, tag = 'input window, operand 1, single buffered']
    #allocation6 [shape = 's32[1]{0}', space=sflag, size = 0x4, scoped, tag = 'scoped memory for tpu_custom_call.1']
    #allocation7 [shape = 'u8[16384]{0}', space=vmem, size = 0x4000, scoped, tag = 'output window, operand 0, single buffered']
    %7 = vsyncpa [#allocation3], 0
    %8 = vsyncpa [#allocation6], 0
    %9 = vsyncpa [#allocation4], 0
    // Predicated region
    $region2: #{tpu_custom_call.1} parent=1 // pred_check
      _
    $region3: #{tpu_custom_call.1} parent=1 // pred_check_branch
      %11 = sbr.rel (0) target = $region5
    $region4: #{tpu_custom_call.1} parent=1 // pred_region
      %s13 = ssub.s32 512, 512
      %14 = vsyncadd [#allocation3], %s13
      %s15 = sshll.u32 [#allocation2], 4
      %s16 = int_to_ptr.vmem [resolvable:$true] %s15
      %21 = dma.hbm_to_vmem [thread:$0]  %s0, 512, %s16, [#allocation3], 256, 256, 16
    $region5: #{tpu_custom_call.1} parent=1 // pred_fallthru
      _
    // Predicated region
    $region6: #{tpu_custom_call.1} parent=1 // pred_check
      _
    $region7: #{tpu_custom_call.1} parent=1 // pred_check_branch
      %23 = sbr.rel (0) target = $region9
    $region8: #{tpu_custom_call.1} parent=1 // pred_region
      %s25 = ssub.s32 256, 256
      %26 = vsyncadd [#allocation6], %s25
      %s28 = sshll.u32 [#allocation5], 4
      %s29 = int_to_ptr.vmem [resolvable:$true] %s28
      %31 = dma.hbm_to_vmem [thread:$0]  %s1, 256, %s29, [#allocation6]
    $region9: #{tpu_custom_call.1} parent=1 // pred_fallthru
      _
    // Predicated region
    $region10: #{tpu_custom_call.1} parent=1 // pred_check
      _
    $region11: #{tpu_custom_call.1} parent=1 // pred_check_branch
      %33 = sbr.rel (0) target = $region13
    $region12: #{tpu_custom_call.1} parent=1 // pred_region
      %34 = dma.done [#allocation3], 512
    $region13: #{tpu_custom_call.1} parent=1 // pred_fallthru
      _
    // Predicated region
    $region14: #{tpu_custom_call.1} parent=1 // pred_check
      _
    $region15: #{tpu_custom_call.1} parent=1 // pred_check_branch
      %36 = sbr.rel (0) target = $region17
    $region16: #{tpu_custom_call.1} parent=1 // pred_region
      %37 = dma.done [#allocation6], 256
    $region17: #{tpu_custom_call.1} parent=1 // pred_fallthru
      _
    %v38 = vld [vmem:[#allocation2] sm:$0xff]
    %v39 = vld [vmem:[#allocation2 + $0x8] sm:$0xff]
    %v40 = vld [vmem:[#allocation2 + $0x10] sm:$0xff]
    %v41 = vld [vmem:[#allocation2 + $0x18] sm:$0xff]
    %v42 = vmul.f32 %v38, 16.0
    %v43 = vmul.f32 %v39, 16.0
    %v44 = vmul.f32 %v40, 16.0
    %v45 = vmul.f32 %v41, 16.0
    %v46 = vld [vmem:[#allocation5] sm:$0xff]
    %v47 = vld [vmem:[#allocation5 + $0x8] sm:$0xff]
    %v48 = vadd.f32 %v42, %v46
    %v49 = vadd.f32 %v43, %v47
    %v50 = vadd.f32 %v44, %v46
    %v51 = vadd.f32 %v45, %v47
    %52 = vst [vmem:[#allocation7] sm:$0xff] %v48
    %53 = vst [vmem:[#allocation7 + $0x8] sm:$0xff] %v49
    %54 = vst [vmem:[#allocation7 + $0x10] sm:$0xff] %v50
    %55 = vst [vmem:[#allocation7 + $0x18] sm:$0xff] %v51
    // Predicated region
    $region18: #{tpu_custom_call.1} parent=1 // pred_check
      _
    $region19: #{tpu_custom_call.1} parent=1 // pred_check_branch
      %57 = sbr.rel (0) target = $region21
    $region20: #{tpu_custom_call.1} parent=1 // pred_region
      %s59 = ssub.s32 512, 512
      %60 = vsyncadd [#allocation4], %s59
      %s61 = sshll.u32 [#allocation7], 4
      %s62 = int_to_ptr.vmem [resolvable:$true] %s61
      %67 = dma.vmem_to_hbm [thread:$0]  %s62, 512, %s2, [#allocation4], 256, 256, 16
    $region21: #{tpu_custom_call.1} parent=1 // pred_fallthru
      _
    // Predicated region
    $region22: #{tpu_custom_call.1} parent=1 // pred_check
      _
    $region23: #{tpu_custom_call.1} parent=1 // pred_check_branch
      %69 = sbr.rel (0) target = $region25
    $region24: #{tpu_custom_call.1} parent=1 // pred_region
      %70 = dma.done [#allocation4], 512
    $region25: #{tpu_custom_call.1} parent=1 // pred_fallthru
      _
    %71 = vsyncpa [#allocation3], 1
    %72 = vsyncpa [#allocation6], 1
    %73 = vsyncpa [#allocation4], 1

</llo_original>
